<compile_context>
chip_gen: v7x
topology: tpu7x:2x2x1
jax: 0.10.0
libtpu: 0.0.40
codegen_flags: <defaults>
</compile_context>

<pallas_src>
import functools
import math

import jax
import jax.numpy as jnp
from jax import lax
from jax.experimental import pallas as pl
from jax.experimental.pallas import tpu as pltpu


# ---------------------------------------------------------------------------
# Kernel
# ---------------------------------------------------------------------------
def _rel_pos_kernel(w_ref, out_ref, *, tq, tk, T, max_rel):
    """One (tq x tk) tile of the relative-position gather.

    w_ref:   (tk*T, tk*H)  block-diagonal weight  kron(I_tk, table)
    out_ref: (tq,  tk*H)   lane-dense output tile (row q, concat over k of H)
    """
    i = pl.program_id(0)          # q-tile index
    j = pl.program_id(1)          # k-tile index
    q0 = i * tq
    k0 = j * tk

    shape = (tq, tk * T)
    rows = lax.broadcasted_iota(jnp.int32, shape, 0)        # local q
    cols = lax.broadcasted_iota(jnp.int32, shape, 1)        # kk*T + t

    # kk = cols // T, computed without vector integer division
    # (T is a small static constant; tk-1 compares, unrolled at trace time).
    kk = jnp.zeros(shape, jnp.int32)
    for m in range(1, tk):
        kk = kk + (cols >= m * T).astype(jnp.int32)

    dist = (k0 + kk) - (q0 + rows)                          # k - q
    idx = jnp.clip(dist, -max_rel, max_rel) + max_rel       # in [0, T)

    # Wide one-hot: exactly one 1 per T-column group, at column kk*T + idx.
    onehot = (cols == kk * T + idx).astype(w_ref.dtype)     # (tq, tk*T)

    out = jnp.dot(onehot, w_ref[...], preferred_element_type=jnp.float32)
    out_ref[...] = out.astype(out_ref.dtype)


# ---------------------------------------------------------------------------
# Tile-size heuristics
# ---------------------------------------------------------------------------
def _divisors(n):
    return [d for d in range(1, n + 1) if n % d == 0]


def _pick_tk(length_k, H, T, max_tk=8, max_fanout=512):
    """k-tile: make the output lane dim (tk*H) a multiple of 128 while keeping
    the kron-weight / MXU fan-out (tk*T) bounded so the kernel stays
    HBM-store bound on every TPU generation.

    Falls back to the full k extent (always a legal block shape) when no
    lane-dense divisor exists, trading masked stores for correctness.
    """
    divs = _divisors(length_k)
    lane_dense = [d for d in divs if (d * H) % 128 == 0]
    if lane_dense:
        capped = [d for d in lane_dense if d <= max_tk and d * T <= max_fanout]
        return capped[-1] if capped else lane_dense[0]
    # No lane-dense divisor: use the full dim (full-extent blocks are always
    # legal even when not (8,128)-aligned).
    return length_k


def _pick_tq(length_q, lane_width, itemsize, target_bytes=4 << 20, max_tq=4096):
    """q-tile: ~4 MiB of output per grid step (amortizes ~0.35 us/step pipeline
    overhead) while staying comfortably inside every chip's scoped-VMEM
    default with double buffering."""
    row_bytes = max(1, lane_width * itemsize)
    cap = min(max_tq, max(8, target_bytes // row_bytes))
    best = None
    for tq in range(8, length_q + 1, 8):
        if length_q % tq == 0 and tq <= cap:
            best = tq
    return best if best is not None else length_q  # full dim always legal


# ---------------------------------------------------------------------------
# Wrapper
# ---------------------------------------------------------------------------
def relative_position_pallas(embeddings_table, length_q, length_k,
                             max_relative_position):
    """Pallas equivalent of RelativePosition.forward(length_q, length_k)."""
    T, H = embeddings_table.shape
    assert T == 2 * max_relative_position + 1

    tk = _pick_tk(length_k, H, T)
    tq = _pick_tq(length_q, tk * H, embeddings_table.dtype.itemsize)

    # Block-diagonal weight: W[kk*T + t, kk*H + h] = table[t, h].
    if tk > 1:
        w = jnp.kron(jnp.eye(tk, dtype=embeddings_table.dtype),
                     embeddings_table)
    else:
        w = embeddings_table

    grid = (length_q // tq, length_k // tk)

    kernel = functools.partial(_rel_pos_kernel, tq=tq, tk=tk, T=T,
                               max_rel=max_relative_position)

    out2d = pl.pallas_call(
        kernel,
        out_shape=jax.ShapeDtypeStruct((length_q, length_k * H),
                                       embeddings_table.dtype),
        grid=grid,
        in_specs=[
            # Resident: same (full) block every step -> DMA'd once.
            pl.BlockSpec((tk * T, tk * H), lambda i, j: (0, 0)),
        ],
        out_specs=pl.BlockSpec((tq, tk * H), lambda i, j: (i, j)),
        compiler_params=pltpu.CompilerParams(
            dimension_semantics=("parallel", "parallel")),
    )(w)

    # Free, row-major-contiguous view back to the PyTorch output layout.
    return out2d.reshape(length_q, length_k, H)


# ---------------------------------------------------------------------------
# Reference / demo
# ---------------------------------------------------------------------------
def _xavier_uniform(key, shape, dtype=jnp.float32):
    """Matches nn.init.xavier_uniform_ for a 2D (fan_out, fan_in) weight."""
    fan_out, fan_in = shape
    bound = math.sqrt(6.0 / (fan_in + fan_out))
    return jax.random.uniform(key, shape, dtype=dtype, minval=-bound,
                              maxval=bound)


def _reference(embeddings_table, length_q, length_k, max_rel):
    """Pure-JAX reference reproducing the PyTorch forward."""
    rq = jnp.arange(length_q)
    rk = jnp.arange(length_k)
    dist = rk[None, :] - rq[:, None]
    idx = jnp.clip(dist, -max_rel, max_rel) + max_rel
    return embeddings_table[idx]


if __name__ == "__main__":
    hidden_size = 32
    max_relative_position = 4          # table has 2*4+1 = 9 rows
    length_q = 8
    length_k = 8

    key = jax.random.PRNGKey(0)
    embeddings_table = _xavier_uniform(
        key, (2 * max_relative_position + 1, hidden_size))

    out = relative_position_pallas(embeddings_table, length_q, length_k,
                                   max_relative_position)
    out = jax.block_until_ready(out)

    ref = _reference(embeddings_table, length_q, length_k,
                     max_relative_position)

    assert out.shape == (length_q, length_k, hidden_size), out.shape
    assert jnp.allclose(out, ref, atol=1e-6), "mismatch vs reference"

    print("KERNEL_OK")
</pallas_src>

<mosaic_0001>
module attributes {stable_mosaic.version = 11 : i64} {
  func.func @_rel_pos_kernel(%arg0: i32, %arg1: i32, %arg2: memref<72x256xf32, #tpu.memory_space<vmem>>, %arg3: memref<8x256xf32, #tpu.memory_space<vmem>>) attributes {dimension_semantics = [#tpu.dimension_semantics<parallel>, #tpu.dimension_semantics<parallel>], iteration_bounds = array<i64: 1, 1>, scalar_prefetch = 0 : i64, scratch_operands = 0 : i64, tpu.core_type = #tpu.core_type<tc>, window_params = [{pipeline_mode = #tpu.pipeline_mode<synchronous>, transform_indices = @transform_0, window_bounds = array<i64: 72, 256>}, {transform_indices = @transform_1, window_bounds = array<i64: 8, 256>}]} {
    %c8_i32 = arith.constant 8 : i32
    %0 = arith.muli %arg0, %c8_i32 : i32
    %c8_i32_0 = arith.constant 8 : i32
    %1 = arith.muli %arg1, %c8_i32_0 : i32
    %2 = tpu.iota {dimensions = array<i32: 0>} : vector<8x72xi32>
    %3 = tpu.iota {dimensions = array<i32: 1>} : vector<8x72xi32>
    %c0_i32 = arith.constant 0 : i32
    %4 = vector.broadcast %c0_i32 : i32 to vector<8x72xi32>
    %c9_i32 = arith.constant 9 : i32
    %5 = vector.broadcast %c9_i32 : i32 to vector<8x72xi32>
    %6 = arith.cmpi sge, %3, %5 : vector<8x72xi32>
    %7 = arith.extui %6 : vector<8x72xi1> to vector<8x72xi32>
    %8 = arith.addi %4, %7 : vector<8x72xi32>
    %c18_i32 = arith.constant 18 : i32
    %9 = vector.broadcast %c18_i32 : i32 to vector<8x72xi32>
    %10 = arith.cmpi sge, %3, %9 : vector<8x72xi32>
    %11 = arith.extui %10 : vector<8x72xi1> to vector<8x72xi32>
    %12 = arith.addi %8, %11 : vector<8x72xi32>
    %c27_i32 = arith.constant 27 : i32
    %13 = vector.broadcast %c27_i32 : i32 to vector<8x72xi32>
    %14 = arith.cmpi sge, %3, %13 : vector<8x72xi32>
    %15 = arith.extui %14 : vector<8x72xi1> to vector<8x72xi32>
    %16 = arith.addi %12, %15 : vector<8x72xi32>
    %c36_i32 = arith.constant 36 : i32
    %17 = vector.broadcast %c36_i32 : i32 to vector<8x72xi32>
    %18 = arith.cmpi sge, %3, %17 : vector<8x72xi32>
    %19 = arith.extui %18 : vector<8x72xi1> to vector<8x72xi32>
    %20 = arith.addi %16, %19 : vector<8x72xi32>
    %c45_i32 = arith.constant 45 : i32
    %21 = vector.broadcast %c45_i32 : i32 to vector<8x72xi32>
    %22 = arith.cmpi sge, %3, %21 : vector<8x72xi32>
    %23 = arith.extui %22 : vector<8x72xi1> to vector<8x72xi32>
    %24 = arith.addi %20, %23 : vector<8x72xi32>
    %c54_i32 = arith.constant 54 : i32
    %25 = vector.broadcast %c54_i32 : i32 to vector<8x72xi32>
    %26 = arith.cmpi sge, %3, %25 : vector<8x72xi32>
    %27 = arith.extui %26 : vector<8x72xi1> to vector<8x72xi32>
    %28 = arith.addi %24, %27 : vector<8x72xi32>
    %c63_i32 = arith.constant 63 : i32
    %29 = vector.broadcast %c63_i32 : i32 to vector<8x72xi32>
    %30 = arith.cmpi sge, %3, %29 : vector<8x72xi32>
    %31 = arith.extui %30 : vector<8x72xi1> to vector<8x72xi32>
    %32 = arith.addi %28, %31 : vector<8x72xi32>
    %33 = vector.broadcast %1 : i32 to vector<8x72xi32>
    %34 = arith.addi %33, %32 : vector<8x72xi32>
    %35 = vector.broadcast %0 : i32 to vector<8x72xi32>
    %36 = arith.addi %35, %2 : vector<8x72xi32>
    %37 = arith.subi %34, %36 : vector<8x72xi32>
    %c-4_i32 = arith.constant -4 : i32
    %c4_i32 = arith.constant 4 : i32
    %38 = vector.broadcast %c-4_i32 : i32 to vector<8x72xi32>
    %39 = arith.maxsi %38, %37 : vector<8x72xi32>
    %40 = vector.broadcast %c4_i32 : i32 to vector<8x72xi32>
    %41 = arith.minsi %40, %39 : vector<8x72xi32>
    %c4_i32_1 = arith.constant 4 : i32
    %42 = vector.broadcast %c4_i32_1 : i32 to vector<8x72xi32>
    %43 = arith.addi %41, %42 : vector<8x72xi32>
    %c9_i32_2 = arith.constant 9 : i32
    %44 = vector.broadcast %c9_i32_2 : i32 to vector<8x72xi32>
    %45 = arith.muli %32, %44 : vector<8x72xi32>
    %46 = arith.addi %45, %43 : vector<8x72xi32>
    %47 = arith.cmpi eq, %3, %46 : vector<8x72xi32>
    %48 = arith.extui %47 : vector<8x72xi1> to vector<8x72xi32>
    %49 = arith.sitofp %48 : vector<8x72xi32> to vector<8x72xf32>
    %c0 = arith.constant 0 : index
    %c0_3 = arith.constant 0 : index
    %50 = vector.load %arg2[%c0, %c0_3] : memref<72x256xf32, #tpu.memory_space<vmem>>, vector<72x256xf32>
    %cst = arith.constant dense<0.000000e+00> : vector<8x256xf32>
    %51 = tpu.matmul %49, %50, %cst {dimension_numbers = #tpu.dot_dimension_numbers<[1], [0], [0], [1], [0, 0, 1, 1], [], []>} : vector<8x72xf32>, vector<72x256xf32>, vector<8x256xf32> -> vector<8x256xf32>
    %c0_4 = arith.constant 0 : index
    %c0_5 = arith.constant 0 : index
    %52 = vector.load %arg3[%c0_4, %c0_5] : memref<8x256xf32, #tpu.memory_space<vmem>>, vector<8x256xf32>
    tpu.vector_store %arg3[%c0_4, %c0_5], %51 {strides = array<i32>} : memref<8x256xf32, #tpu.memory_space<vmem>>, vector<8x256xf32>,
    return
  }
  func.func @transform_0(%arg0: i32, %arg1: i32) -> (i32, i32) {
    %c0_i32 = arith.constant 0 : i32
    %c0_i32_0 = arith.constant 0 : i32
    %c0_i32_1 = arith.constant 0 : i32
    return %c0_i32, %c0_i32_0 : i32, i32
  }
  func.func @transform_1(%arg0: i32, %arg1: i32) -> (i32, i32) {
    %c0_i32 = arith.constant 0 : i32
    return %arg0, %arg1 : i32, i32
  }
}

</mosaic_0001>

<llo_original>
// kernel: tpu_custom_call.1
$region0: #{tpu_custom_call.1}
  #allocation0 [shape = 'u32[]', space=smem, size = 0x4, offset = 0x4, fixed_abs, tag = 'smem constant byte address 0x4 - core index']
  #allocation1 [shape = 'u32[144,128]{1,0:T(1,128)}', space=vmem, size = 0x12000, scoped, tag = 'internal scratch']
  %s0 = inlined_call_operand.hbm [shape: f32[72,256], index: 0, kind: input, shape index: {}]
  %s1 = inlined_call_operand.hbm [shape: f32[8,256], index: 1, kind: output, shape index: {}]
  %s2 = sld [smem:[#allocation0]]
  $region18: #{tpu_custom_call.1} parent=0
    _
  %s4 = ssub.s32 1, %s2
  %s5 = scalar_select 0, %s4, %s2
  $region1: #{tpu_custom_call.1} parent=0
    #allocation2 [shape = 'u8[73728]{0}', space=vmem, size = 0x12000, scoped, tag = 'input window, operand 0, single buffered']
    #allocation3 [shape = 's32[1]{0}', space=sflag, size = 0x4, scoped, tag = 'scoped memory for tpu_custom_call.1']
    #allocation4 [shape = 's32[1]{0}', space=sflag, size = 0x4, scoped, tag = 'scoped memory for tpu_custom_call.1']
    #allocation5 [shape = 'u8[8192]{0}', space=vmem, size = 0x2000, scoped, tag = 'output window, operand 0, single buffered']
    %6 = vsyncpa [#allocation3], 0
    %7 = vsyncpa [#allocation4], 0
    // Predicated region
    $region2: #{tpu_custom_call.1} parent=1 // pred_check
      _
    $region3: #{tpu_custom_call.1} parent=1 // pred_check_branch
      %9 = sbr.rel (0) target = $region5
    $region4: #{tpu_custom_call.1} parent=1 // pred_region
      %s11 = ssub.s32 2304, 2304
      %12 = vsyncadd [#allocation3], %s11
      %s13 = sshll.u32 [#allocation2], 4
      %s14 = int_to_ptr.vmem [resolvable:$true] %s13
      %19 = dma.hbm_to_vmem [thread:$0]  %s0, 2304, %s14, [#allocation3], 256, 256, 16
    $region5: #{tpu_custom_call.1} parent=1 // pred_fallthru
      _
    // Predicated region
    $region6: #{tpu_custom_call.1} parent=1 // pred_check
      _
    $region7: #{tpu_custom_call.1} parent=1 // pred_check_branch
      %21 = sbr.rel (0) target = $region9
    $region8: #{tpu_custom_call.1} parent=1 // pred_region
      %22 = dma.done [#allocation3], 2304
    $region9: #{tpu_custom_call.1} parent=1 // pred_fallthru
      _
    %s23 = smul.u32 0, 8
    %s24 = smul.u32 0, 8
    %v25 = vlaneseq
    %v26 = vshrl.u32 %v25, 7
    %v27 = vlaneseq
    %v28 = vand.u32 %v27, 127
    %vm29 = vcmp.ge.s32.totalorder %v28, 9
    %v30 = vsel %vm29, 1, 0
    %vm31 = vcmp.ge.s32.totalorder %v28, 18
    %v32 = vsel %vm31, 1, 0
    %v33 = vadd.s32 %v30, %v32
    %vm34 = vcmp.ge.s32.totalorder %v28, 27
    %v35 = vsel %vm34, 1, 0
    %v36 = vadd.s32 %v33, %v35
    %vm37 = vcmp.ge.s32.totalorder %v28, 36
    %v38 = vsel %vm37, 1, 0
    %v39 = vadd.s32 %v36, %v38
    %vm40 = vcmp.ge.s32.totalorder %v28, 45
    %v41 = vsel %vm40, 1, 0
    %v42 = vadd.s32 %v39, %v41
    %vm43 = vcmp.ge.s32.totalorder %v28, 54
    %v44 = vsel %vm43, 1, 0
    %v45 = vadd.s32 %v42, %v44
    %vm46 = vcmp.ge.s32.totalorder %v28, 63
    %v47 = vsel %vm46, 1, 0
    %v48 = vadd.s32 %v45, %v47
    %v49 = vstv %s24
    %v50 = vadd.s32 %v49, %v48
    %v51 = vstv %s23
    %v52 = vadd.s32 %v51, %v26
    %v53 = vsub.s32 %v50, %v52
    %vm54 = vcmp.gt.s32.totalorder %v53, 4294967292
    %v55 = vsel %vm54, %v53, 4294967292
    %vm56 = vcmp.lt.s32.totalorder %v55, 4
    %v57 = vsel %vm56, %v55, 4
    %v58 = vadd.s32 %v57, 4
    %v59 = vmul.u32 %v48, 9
    %v60 = vadd.s32 %v59, %v58
    %vm61 = vcmp.eq.s32.totalorder %v28, %v60
    %v62 = vsel %vm61, 1, 0
    %v63 = vcvt.s32.f32 %v62
    %v64 = vld [vmem:[#allocation2] sm:$0xff]
    %v65 = vld [vmem:[#allocation2 + $0x8] sm:$0xff]
    %v66 = vld [vmem:[#allocation2 + $0x10] sm:$0xff]
    %v67 = vld [vmem:[#allocation2 + $0x18] sm:$0xff]
    %v68 = vld [vmem:[#allocation2 + $0x20] sm:$0xff]
    %v69 = vld [vmem:[#allocation2 + $0x28] sm:$0xff]
    %v70 = vld [vmem:[#allocation2 + $0x30] sm:$0xff]
    %v71 = vld [vmem:[#allocation2 + $0x38] sm:$0xff]
    %v72 = vld [vmem:[#allocation2 + $0x40] sm:$0xff]
    %v73 = vld [vmem:[#allocation2 + $0x48] sm:$0xff]
    %v74 = vld [vmem:[#allocation2 + $0x50] sm:$0xff]
    %v75 = vld [vmem:[#allocation2 + $0x58] sm:$0xff]
    %v76 = vld [vmem:[#allocation2 + $0x60] sm:$0xff]
    %v77 = vld [vmem:[#allocation2 + $0x68] sm:$0xff]
    %v78 = vld [vmem:[#allocation2 + $0x70] sm:$0xff]
    %v79 = vld [vmem:[#allocation2 + $0x78] sm:$0xff]
    %v80 = vld [vmem:[#allocation2 + $0x80] sm:$0xff]
    %v81 = vld [vmem:[#allocation2 + $0x88] sm:$0xff]
    %vm82 = vcmask 588800
    %v84 = vsel %vm82, %v63, 0
    %86 = vmatprep.subr.mxu0 %v65
    %87 = vmatpush1.msra.mxu0 %v64
    %88 = vmatprep.subr.mxu0 %v67
    %89 = vmatpush1.msra.mxu0 %v66
    %90 = vmatprep.subr.mxu0 %v69
    %91 = vmatpush1.msra.mxu0 %v68
    %92 = vmatprep.subr.mxu0 %v71
    %93 = vmatpush1.msra.mxu0 %v70
    %94 = vmatprep.subr.mxu0 %v73
    %95 = vmatpush1.msra.mxu0 %v72
    %96 = vmatprep.subr.mxu0 %v75
    %97 = vmatpush1.msra.mxu0 %v74
    %98 = vmatprep.subr.mxu0 %v77
    %99 = vmatpush1.msra.mxu0 %v76
    %100 = vmatprep.subr.mxu0 %v79
    %101 = vmatpush1.msra.mxu0 %v78
    %102 = vmatprep.subr.mxu0 %v81
    %103 = vmatpush1.msra.mxu0 %v80
    %104 = vmatprep.subr.mxu0 0.0
    %105 = vmatpush1.msra.mxu0 0.0
    %106 = vmatprep.subr.mxu0 0.0
    %107 = vmatpush1.msra.mxu0 0.0
    %108 = vmatprep.subr.mxu0 0.0
    %109 = vmatpush1.msra.mxu0 0.0
    %110 = vmatprep.subr.mxu0 0.0
    %111 = vmatpush1.msra.mxu0 0.0
    %112 = vmatprep.subr.mxu0 0.0
    %113 = vmatpush1.msra.mxu0 0.0
    %114 = vmatprep.subr.mxu0 0.0
    %115 = vmatpush1.msra.mxu0 0.0
    %116 = vmatprep.subr.mxu0 0.0
    %117 = vmatpush1.msra.mxu0 0.0
    %118 = vmatprep.subr.mxu0 0.0
    %119 = vmatpush1.msra.mxu0 0.0
    %120 = vmatprep.subr.mxu0 0.0
    %121 = vmatpush1.msra.mxu0 0.0
    %122 = vmatprep.subr.mxu0 0.0
    %123 = vmatpush1.msra.mxu0 0.0
    %124 = vmatprep.subr.mxu0 0.0
    %125 = vmatpush1.msra.mxu0 0.0
    %126 = vmatprep.subr.mxu0 0.0
    %127 = vmatpush1.msra.mxu0 0.0
    %128 = vmatprep.subr.mxu0 0.0
    %129 = vmatpush1.msra.mxu0 0.0
    %130 = vmatprep.subr.mxu0 0.0
    %131 = vmatpush1.msra.mxu0 0.0
    %132 = vmatprep.subr.mxu0 0.0
    %133 = vmatpush1.msra.mxu0 0.0
    %134 = vmatprep.subr.mxu0 0.0
    %135 = vmatpush1.msra.mxu0 0.0
    %136 = vmatprep.subr.mxu0 0.0
    %137 = vmatpush1.msra.mxu0 0.0
    %138 = vmatprep.subr.mxu0 0.0
    %139 = vmatpush1.msra.mxu0 0.0
    %140 = vmatprep.subr.mxu0 0.0
    %141 = vmatpush1.msra.mxu0 0.0
    %142 = vmatprep.subr.mxu0 0.0
    %143 = vmatpush1.msra.mxu0 0.0
    %144 = vmatprep.subr.mxu0 0.0
    %145 = vmatpush1.msra.mxu0 0.0
    %146 = vmatprep.subr.mxu0 0.0
    %147 = vmatpush1.msra.mxu0 0.0
    %148 = vmatprep.subr.mxu0 0.0
    %149 = vmatpush1.msra.mxu0 0.0
    %150 = vmatprep.mubr.f32.mxu0 0.0
    %151 = vmatmul.mubr.f32.gmra.mrb[0].mxu0 %v84
    %v152 = vpop.f32.mrb[0].mxu0
    %v153 = vadd.f32 0.0, %v152
    %v154 = vpop.f32.mrb[0].mxu0
    %v155 = vadd.f32 0.0, %v154
    %156 = vdwg.mxu0
    %157 = vst [vmem:[#allocation5] sm:$0xff] %v153
    %158 = vst [vmem:[#allocation5 + $0x8] sm:$0xff] %v155
    // Predicated region
    $region10: #{tpu_custom_call.1} parent=1 // pred_check
      _
    $region11: #{tpu_custom_call.1} parent=1 // pred_check_branch
      %160 = sbr.rel (0) target = $region13
    $region12: #{tpu_custom_call.1} parent=1 // pred_region
      %s162 = ssub.s32 256, 256
      %163 = vsyncadd [#allocation4], %s162
      %s165 = sshll.u32 [#allocation5], 4
      %s166 = int_to_ptr.vmem [resolvable:$true] %s165
      %168 = dma.vmem_to_hbm [thread:$0]  %s166, 256, %s1, [#allocation4]
    $region13: #{tpu_custom_call.1} parent=1 // pred_fallthru
      _
    // Predicated region
    $region14: #{tpu_custom_call.1} parent=1 // pred_check
      _
    $region15: #{tpu_custom_call.1} parent=1 // pred_check_branch
      %170 = sbr.rel (0) target = $region17
    $region16: #{tpu_custom_call.1} parent=1 // pred_region
      %171 = dma.done [#allocation4], 256
    $region17: #{tpu_custom_call.1} parent=1 // pred_fallthru
      _
    %172 = vsyncpa [#allocation3], 1
    %173 = vsyncpa [#allocation4], 1

</llo_original>
